<compile_context>
chip_gen: v6e
topology: v6e:2x2x1
jax: 0.10.0
libtpu: 0.0.40
codegen_flags: <defaults>
</compile_context>

<pallas_src>
import functools

import jax
import jax.numpy as jnp
from jax import lax
from jax.experimental import pallas as pl
from jax.experimental.pallas import tpu as pltpu


# ---------------------------------------------------------------------------
# Kernel: one grid cell = one (C_blk, TB, L) slab -> scalar partial sums.
# ---------------------------------------------------------------------------
def _tv_loss_kernel(x_ref, *rest, w, fold, tiled):
    if tiled:
        halo_ref, oh_ref, ow_ref = rest
    else:
        halo_ref = None
        oh_ref, ow_ref = rest

    x = x_ref[...]                      # (C_blk, TB, L), input dtype
    tb = x.shape[1]
    l = x.shape[2]
    f32 = jnp.float32

    # ---- horizontal (width) pairs: next element within an image row. ----
    if l > 1:
        dw = (x[:, :, 1:] - x[:, :, : l - 1]).astype(f32)       # (C_blk, TB, L-1)
        if fold > 1:
            # `fold` image rows are packed along the lane axis (w is a power of
            # two); drop the pairs that straddle two packed image rows.
            lane = lax.broadcasted_iota(jnp.int32, dw.shape, 2)
            dw = jnp.where((lane & (w - 1)) != (w - 1), dw, 0.0)
        w_part = jnp.sum(dw * dw)
    else:
        w_part = f32(0.0)

    # ---- vertical (height) pairs: same column, next image row. ----
    h_part = f32(0.0)
    if fold > 1:
        # (a) both rows live in the same slab row, w lanes apart.
        da = (x[:, :, w:] - x[:, :, : l - w]).astype(f32)
        h_part = h_part + jnp.sum(da * da)
        # (b) last packed row of slab row r -> first packed row of slab row r+1.
        if tb > 1:
            db = (x[:, 1:, :w] - x[:, : tb - 1, l - w:]).astype(f32)
            h_part = h_part + jnp.sum(db * db)
    else:
        if tb > 1:
            dh = (x[:, 1:, :] - x[:, : tb - 1, :]).astype(f32)
            h_part = h_part + jnp.sum(dh * dh)

    # ---- seam between two row tiles of the same image (tiled path only). ----
    if tiled:
        j = pl.program_id(1)
        halo = halo_ref[...]                       # (C_blk, 8, L), tiny
        prev_row = halo[:, -1, :]                  # last row of previous tile
        cur_row = x[:, 0, :]                       # first row of this tile
        ds = (cur_row - prev_row).astype(f32)
        ds = jnp.where(j > 0, ds, 0.0)             # tile 0 has no upper seam
        h_part = h_part + jnp.sum(ds * ds)

    oh_ref[...] = h_part.reshape(1, 1, 1, 1)
    ow_ref[...] = w_part.reshape(1, 1, 1, 1)


# ---------------------------------------------------------------------------
# Tiling heuristics.
# ---------------------------------------------------------------------------
def _largest_divisor_leq(n, limit):
    limit = max(1, min(n, int(limit)))
    for d in range(limit, 0, -1):
        if n % d == 0:
            return d
    return 1


def _choose_fold(h, w):
    """Power-of-two number of image rows to pack into the lane axis."""
    if w <= 0 or w >= 128 or (w & (w - 1)) != 0:
        return 1
    cands = []
    f = 1
    while f * w <= 512 and h % f == 0:
        cands.append(f)
        f *= 2
    if not cands:
        return 1
    dense_rows = [f for f in cands if (h // f) % 8 == 0]   # keep sublanes dense too
    return max(dense_rows) if dense_rows else max(cands)


def _padded_bytes(rows, lanes, itemsize):
    return (-(-rows // 8) * 8) * (-(-lanes // 128) * 128) * itemsize


# ---------------------------------------------------------------------------
# Wrapper.
# ---------------------------------------------------------------------------
def tv_loss(x, tv_loss_weight=1.0):
    """Total-variation loss of an NCHW tensor (matches the PyTorch TVLoss)."""
    assert x.ndim == 4, "TVLoss expects an NCHW tensor"
    n, c, h, w = x.shape
    nc = n * c
    count_h = c * (h - 1) * w          # numel of x[:, :, 1:, :]
    count_w = c * h * (w - 1)          # numel of x[:, :, :, 1:]
    itemsize = jnp.dtype(x.dtype).itemsize

    # ~2 MiB main blocks: near the HBM roofline, yet double buffering plus
    # in-kernel f32 temporaries stay well inside scoped VMEM on v5e/v6e/v7x.
    target_bytes = 2 << 20

    raw_img = h * w * itemsize
    if raw_img <= target_bytes:
        # Whole (n, c) images per block; optionally fold rows into the lanes.
        fold = _choose_fold(h, w)
        lanes = fold * w
        rows = h // fold
        blk_img = _padded_bytes(rows, lanes, itemsize)
        c_blk = _largest_divisor_leq(nc, target_bytes // max(blk_img, 1))
        tb = rows
        n_h = 1
    else:
        # Image too large for one block: tile the row axis (halo handles seams).
        fold = 1
        lanes = w
        rows = h
        c_blk = 1
        divs8 = [d for d in range(8, h + 1, 8) if h % d == 0]
        fits = [d for d in divs8 if _padded_bytes(d, w, itemsize) <= target_bytes]
        if fits:
            tb = max(fits)
        elif divs8:
            tb = min(divs8)
        else:
            tb = h                      # no clean row tiling; single big block
        n_h = rows // tb
    tiled = n_h > 1
    assert not (tiled and fold > 1)

    x_slab = x.reshape(nc, rows, lanes)      # pure metadata reshape of NCHW
    n_i = nc // c_blk
    grid = (n_i, n_h)

    in_specs = [pl.BlockSpec((c_blk, tb, lanes), lambda i, j: (i, j, 0))]
    operands = [x_slab]
    if tiled:
        halo_rows = 8                        # tb % 8 == 0 whenever tiled
        hb = tb // halo_rows
        in_specs.append(
            pl.BlockSpec(
                (c_blk, halo_rows, lanes),
                lambda i, j: (i, jnp.maximum(j * hb - 1, 0), 0),
            )
        )
        operands.append(x_slab)

    out_shape = (
        jax.ShapeDtypeStruct((n_i, n_h, 1, 1), jnp.float32),
        jax.ShapeDtypeStruct((n_i, n_h, 1, 1), jnp.float32),
    )
    out_specs = [
        pl.BlockSpec((1, 1, 1, 1), lambda i, j: (i, j, 0, 0)),
        pl.BlockSpec((1, 1, 1, 1), lambda i, j: (i, j, 0, 0)),
    ]

    # VMEM budget: double-buffered inputs + headroom for f32 temporaries.
    block_bytes = c_blk * _padded_bytes(tb, lanes, itemsize)
    halo_bytes = c_blk * _padded_bytes(8, lanes, itemsize) if tiled else 0
    temps_bytes = 8 * c_blk * _padded_bytes(tb, lanes, 4)
    vmem_need = 2 * (block_bytes + halo_bytes) + temps_bytes + (1 << 20)
    vmem_limit = int(min(max(vmem_need, 32 << 20), 100 << 20))

    total = n * c * h * w
    cost = pl.CostEstimate(
        flops=6 * total,
        transcendentals=0,
        bytes_accessed=total * itemsize + halo_bytes * n_i * n_h + 8 * n_i * n_h,
    )

    kernel = functools.partial(_tv_loss_kernel, w=w, fold=fold, tiled=tiled)

    oh, ow = pl.pallas_call(
        kernel,
        out_shape=out_shape,
        grid_spec=pltpu.PrefetchScalarGridSpec(
            num_scalar_prefetch=0,
            grid=grid,
            in_specs=in_specs,
            out_specs=out_specs,
        ),
        compiler_params=pltpu.CompilerParams(
            dimension_semantics=("parallel", "parallel"),
            vmem_limit_bytes=vmem_limit,
        ),
        cost_estimate=cost,
    )(*operands)

    h_tv = jnp.sum(oh)
    w_tv = jnp.sum(ow)
    # NOTE: h == 1 or w == 1 divides by zero, same as the PyTorch reference.
    return (
        jnp.float32(float(tv_loss_weight))
        * 2.0
        * (h_tv / jnp.float32(count_h) + w_tv / jnp.float32(count_w))
        / jnp.float32(n)
    )


def tv_loss_ref(x, tv_loss_weight=1.0):
    """Pure-JAX reference matching the PyTorch module."""
    x = x.astype(jnp.float32)
    n, c, h, w = x.shape
    count_h = c * (h - 1) * w
    count_w = c * h * (w - 1)
    h_tv = jnp.sum((x[:, :, 1:, :] - x[:, :, : h - 1, :]) ** 2)
    w_tv = jnp.sum((x[:, :, :, 1:] - x[:, :, :, : w - 1]) ** 2)
    return tv_loss_weight * 2.0 * (h_tv / count_h + w_tv / count_w) / n


if __name__ == "__main__":
    k0, k1, k2 = jax.random.split(jax.random.PRNGKey(0), 3)

    # Primary small example: folded lane-dense path, single block, grid (1, 1).
    x = jax.random.normal(k0, (2, 4, 16, 16), dtype=jnp.float32)
    out = jax.block_until_ready(tv_loss(x, tv_loss_weight=1.0))
    ref = tv_loss_ref(x, 1.0)
    assert jnp.allclose(out, ref, rtol=1e-4, atol=1e-6), (out, ref)

    # Irregular (non power-of-two) spatial dims -> plain un-folded path.
    x2 = jax.random.normal(k1, (2, 3, 10, 12), dtype=jnp.float32)
    out2 = jax.block_until_ready(tv_loss(x2, tv_loss_weight=0.5))
    ref2 = tv_loss_ref(x2, 0.5)
    assert jnp.allclose(out2, ref2, rtol=1e-4, atol=1e-6), (out2, ref2)

    # Larger image -> row-tiled path with halo seams (3 row tiles).
    x3 = jax.random.normal(k2, (1, 1, 1152, 1024), dtype=jnp.float32)
    out3 = jax.block_until_ready(tv_loss(x3, tv_loss_weight=1.0))
    ref3 = tv_loss_ref(x3, 1.0)
    assert jnp.allclose(out3, ref3, rtol=1e-4, atol=1e-6), (out3, ref3)

    print("KERNEL_OK")
</pallas_src>

<mosaic_0001>
module attributes {stable_mosaic.version = 11 : i64} {
  func.func @_tv_loss_kernel(%arg0: i32, %arg1: i32, %arg2: memref<8x8x32xf32, #tpu.memory_space<vmem>>, %arg3: memref<1x1x1x1xf32, #tpu.memory_space<vmem>>, %arg4: memref<1x1x1x1xf32, #tpu.memory_space<vmem>>) attributes {dimension_semantics = [#tpu.dimension_semantics<parallel>, #tpu.dimension_semantics<parallel>], iteration_bounds = array<i64: 1, 1>, scalar_prefetch = 0 : i64, scratch_operands = 0 : i64, tpu.core_type = #tpu.core_type<tc>, window_params = [{transform_indices = @transform_0, window_bounds = array<i64: 8, 8, 32>}, {transform_indices = @transform_1, window_bounds = array<i64: 1, 1, 1, 1>}, {transform_indices = @transform_2, window_bounds = array<i64: 1, 1, 1, 1>}]} {
    %c0 = arith.constant 0 : index
    %c0_0 = arith.constant 0 : index
    %c0_1 = arith.constant 0 : index
    %0 = vector.load %arg2[%c0, %c0_0, %c0_1] : memref<8x8x32xf32, #tpu.memory_space<vmem>>, vector<8x8x32xf32>
    %1 = vector.extract_strided_slice %0 {offsets = [0, 0, 1], sizes = [8, 8, 31], strides = [1, 1, 1]} : vector<8x8x32xf32> to vector<8x8x31xf32>
    %2 = vector.extract_strided_slice %0 {offsets = [0, 0, 0], sizes = [8, 8, 31], strides = [1, 1, 1]} : vector<8x8x32xf32> to vector<8x8x31xf32>
    %3 = arith.subf %1, %2 : vector<8x8x31xf32>
    %4 = tpu.iota {dimensions = array<i32: 2>} : vector<8x8x31xi32>
    %c15_i32 = arith.constant 15 : i32
    %5 = vector.broadcast %c15_i32 : i32 to vector<8x8x31xi32>
    %6 = arith.andi %4, %5 : vector<8x8x31xi32>
    %c15_i32_2 = arith.constant 15 : i32
    %7 = vector.broadcast %c15_i32_2 : i32 to vector<8x8x31xi32>
    %8 = arith.cmpi ne, %6, %7 : vector<8x8x31xi32>
    %cst = arith.constant 0.000000e+00 : f32
    %9 = vector.broadcast %cst : f32 to vector<8x8x31xf32>
    %10 = arith.select %8, %3, %9 : vector<8x8x31xi1>, vector<8x8x31xf32>
    %11 = arith.mulf %10, %10 : vector<8x8x31xf32>
    %12 = vector.shape_cast %11 : vector<8x8x31xf32> to vector<1x8x8x31xf32>
    %cst_3 = arith.constant dense<0.000000e+00> : vector<1xf32>
    %13 = vector.multi_reduction <add>, %12, %cst_3 [1, 2, 3] : vector<1x8x8x31xf32> to vector<1xf32>
    %14 = vector.shape_cast %13 : vector<1xf32> to vector<1x1x1x1xf32>
    %15 = vector.extract %14[0, 0, 0, 0] : f32 from vector<1x1x1x1xf32>
    %16 = vector.extract_strided_slice %0 {offsets = [0, 0, 16], sizes = [8, 8, 16], strides = [1, 1, 1]} : vector<8x8x32xf32> to vector<8x8x16xf32>
    %17 = vector.extract_strided_slice %0 {offsets = [0, 0, 0], sizes = [8, 8, 16], strides = [1, 1, 1]} : vector<8x8x32xf32> to vector<8x8x16xf32>
    %18 = arith.subf %16, %17 : vector<8x8x16xf32>
    %19 = arith.mulf %18, %18 : vector<8x8x16xf32>
    %20 = vector.shape_cast %19 : vector<8x8x16xf32> to vector<1x8x8x16xf32>
    %cst_4 = arith.constant dense<0.000000e+00> : vector<1xf32>
    %21 = vector.multi_reduction <add>, %20, %cst_4 [1, 2, 3] : vector<1x8x8x16xf32> to vector<1xf32>
    %22 = vector.shape_cast %21 : vector<1xf32> to vector<1x1x1x1xf32>
    %23 = vector.extract %22[0, 0, 0, 0] : f32 from vector<1x1x1x1xf32>
    %cst_5 = arith.constant 0.000000e+00 : f32
    %24 = arith.addf %cst_5, %23 : f32
    %25 = vector.extract_strided_slice %0 {offsets = [0, 1, 0], sizes = [8, 7, 16], strides = [1, 1, 1]} : vector<8x8x32xf32> to vector<8x7x16xf32>
    %26 = vector.extract_strided_slice %0 {offsets = [0, 0, 16], sizes = [8, 7, 16], strides = [1, 1, 1]} : vector<8x8x32xf32> to vector<8x7x16xf32>
    %27 = arith.subf %25, %26 : vector<8x7x16xf32>
    %28 = arith.mulf %27, %27 : vector<8x7x16xf32>
    %29 = vector.shape_cast %28 : vector<8x7x16xf32> to vector<1x8x7x16xf32>
    %cst_6 = arith.constant dense<0.000000e+00> : vector<1xf32>
    %30 = vector.multi_reduction <add>, %29, %cst_6 [1, 2, 3] : vector<1x8x7x16xf32> to vector<1xf32>
    %31 = vector.shape_cast %30 : vector<1xf32> to vector<1x1x1x1xf32>
    %32 = vector.extract %31[0, 0, 0, 0] : f32 from vector<1x1x1x1xf32>
    %33 = arith.addf %24, %32 : f32
    %34 = vector.broadcast %33 : f32 to vector<1x1x1x1xf32>
    %c0_7 = arith.constant 0 : index
    %c0_8 = arith.constant 0 : index
    %c0_9 = arith.constant 0 : index
    %c0_10 = arith.constant 0 : index
    %35 = vector.load %arg3[%c0_7, %c0_8, %c0_9, %c0_10] : memref<1x1x1x1xf32, #tpu.memory_space<vmem>>, vector<1x1x1x1xf32>
    tpu.vector_store %arg3[%c0_7, %c0_8, %c0_9, %c0_10], %34 {strides = array<i32>} : memref<1x1x1x1xf32, #tpu.memory_space<vmem>>, vector<1x1x1x1xf32>,
    %36 = vector.broadcast %15 : f32 to vector<1x1x1x1xf32>
    %c0_11 = arith.constant 0 : index
    %c0_12 = arith.constant 0 : index
    %c0_13 = arith.constant 0 : index
    %c0_14 = arith.constant 0 : index
    %37 = vector.load %arg4[%c0_11, %c0_12, %c0_13, %c0_14] : memref<1x1x1x1xf32, #tpu.memory_space<vmem>>, vector<1x1x1x1xf32>
    tpu.vector_store %arg4[%c0_11, %c0_12, %c0_13, %c0_14], %36 {strides = array<i32>} : memref<1x1x1x1xf32, #tpu.memory_space<vmem>>, vector<1x1x1x1xf32>,
    return
  }
  func.func @transform_0(%arg0: i32, %arg1: i32) -> (i32, i32, i32) {
    %c0_i32 = arith.constant 0 : i32
    %c0_i32_0 = arith.constant 0 : i32
    return %arg0, %arg1, %c0_i32 : i32, i32, i32
  }
  func.func @transform_1(%arg0: i32, %arg1: i32) -> (i32, i32, i32, i32) {
    %c0_i32 = arith.constant 0 : i32
    %c0_i32_0 = arith.constant 0 : i32
    %c0_i32_1 = arith.constant 0 : i32
    return %arg0, %arg1, %c0_i32, %c0_i32_0 : i32, i32, i32, i32
  }
  func.func @transform_2(%arg0: i32, %arg1: i32) -> (i32, i32, i32, i32) {
    %c0_i32 = arith.constant 0 : i32
    %c0_i32_0 = arith.constant 0 : i32
    %c0_i32_1 = arith.constant 0 : i32
    return %arg0, %arg1, %c0_i32, %c0_i32_0 : i32, i32, i32, i32
  }
}

</mosaic_0001>

<llo_original>
// kernel: tpu_custom_call.1
$region0: #{tpu_custom_call.1}
  #allocation0 [shape = 'u32[]', space=smem, size = 0x4, offset = 0x4, fixed_abs, tag = 'smem constant byte address 0x4 - core index']
  #allocation1 [shape = 'u32[144,128]{1,0:T(1,128)}', space=vmem, size = 0x12000, scoped, tag = 'internal scratch']
  %s0 = inlined_call_operand.hbm [shape: f32[8,8,32], index: 0, kind: input, shape index: {}]
  %s1 = inlined_call_operand.hbm [shape: f32[1,1,1,1], index: 1, kind: output, shape index: {0}]
  %s2 = inlined_call_operand.hbm [shape: f32[1,1,1,1], index: 2, kind: output, shape index: {1}]
  %3 = xla_tuple %s1, %s2
  %s4 = sld [smem:[#allocation0]]
  $region26: #{tpu_custom_call.1} parent=0
    _
  %s6 = ssub.s32 1, %s4
  %s7 = scalar_select 0, %s6, %s4
  $region1: #{tpu_custom_call.1} parent=0
    #allocation2 [shape = 'u8[32768]{0}', space=vmem, size = 0x8000, scoped, tag = 'input window, operand 0, single buffered']
    #allocation3 [shape = 's32[1]{0}', space=sflag, size = 0x4, scoped, tag = 'scoped memory for tpu_custom_call.1']
    #allocation4 [shape = 's32[1]{0}', space=sflag, size = 0x4, scoped, tag = 'scoped memory for tpu_custom_call.1']
    #allocation5 [shape = 'u8[512]{0}', space=vmem, size = 0x400, scoped, tag = 'output window, operand 0, single buffered']
    #allocation6 [shape = 'u8[512]{0}', space=vmem, size = 0x400, scoped, tag = 'output window, operand 1, single buffered']
    #allocation7 [shape = 's32[1]{0}', space=sflag, size = 0x4, scoped, tag = 'scoped memory for tpu_custom_call.1']
    %8 = vsyncpa [#allocation3], 0
    %9 = vsyncpa [#allocation4], 0
    %10 = vsyncpa [#allocation7], 0
    // Predicated region
    $region2: #{tpu_custom_call.1} parent=1 // pred_check
      _
    $region3: #{tpu_custom_call.1} parent=1 // pred_check_branch
      %12 = sbr.rel (0) target = $region5
    $region4: #{tpu_custom_call.1} parent=1 // pred_region
      %s14 = ssub.s32 1024, 1024
      %15 = vsyncadd [#allocation3], %s14
      %s16 = sshll.u32 [#allocation2], 4
      %s17 = int_to_ptr.vmem [resolvable:$true] %s16
      %22 = dma.hbm_to_vmem [thread:$0]  %s0, 1024, %s17, [#allocation3], 128, 128, 8
    $region5: #{tpu_custom_call.1} parent=1 // pred_fallthru
      _
    // Predicated region
    $region6: #{tpu_custom_call.1} parent=1 // pred_check
      _
    $region7: #{tpu_custom_call.1} parent=1 // pred_check_branch
      %24 = sbr.rel (0) target = $region9
    $region8: #{tpu_custom_call.1} parent=1 // pred_region
      %25 = dma.done [#allocation3], 1024
    $region9: #{tpu_custom_call.1} parent=1 // pred_fallthru
      _
    %v26 = vld [vmem:[#allocation2] sm:$0xff]
    %v27 = vld [vmem:[#allocation2 + $0x8] sm:$0xff]
    %v28 = vld [vmem:[#allocation2 + $0x10] sm:$0xff]
    %v29 = vld [vmem:[#allocation2 + $0x18] sm:$0xff]
    %v30 = vld [vmem:[#allocation2 + $0x20] sm:$0xff]
    %v31 = vld [vmem:[#allocation2 + $0x28] sm:$0xff]
    %v32 = vld [vmem:[#allocation2 + $0x30] sm:$0xff]
    %v33 = vld [vmem:[#allocation2 + $0x38] sm:$0xff]
    %42 = vrot.lane.b32.xlu0 %v26, 1
    %v43 = vpop.permute.xlu0 %42
    %44 = vrot.lane.b32.xlu0 %v27, 1
    %v45 = vpop.permute.xlu0 %44
    %46 = vrot.lane.b32.xlu0 %v28, 1
    %v47 = vpop.permute.xlu0 %46
    %48 = vrot.lane.b32.xlu0 %v29, 1
    %v49 = vpop.permute.xlu0 %48
    %50 = vrot.lane.b32.xlu0 %v30, 1
    %v51 = vpop.permute.xlu0 %50
    %52 = vrot.lane.b32.xlu0 %v31, 1
    %v53 = vpop.permute.xlu0 %52
    %54 = vrot.lane.b32.xlu0 %v32, 1
    %v55 = vpop.permute.xlu0 %54
    %56 = vrot.lane.b32.xlu0 %v33, 1
    %v57 = vpop.permute.xlu0 %56
    %v66 = vsub.f32 %v26, %v43
    %v67 = vsub.f32 %v27, %v45
    %v68 = vsub.f32 %v28, %v47
    %v69 = vsub.f32 %v29, %v49
    %v70 = vsub.f32 %v30, %v51
    %v71 = vsub.f32 %v31, %v53
    %v72 = vsub.f32 %v32, %v55
    %v73 = vsub.f32 %v33, %v57
    %v74 = vlaneseq
    %v75 = vand.u32 %v74, 127
    %v76 = vand.u32 %v75, 15
    %vm77 = vcmp.ne.s32.totalorder %v76, 15
    %86 = vrot.lane.b32.xlu0 %v66, 127
    %v87 = vpop.permute.xlu0 %86
    %88 = vrot.lane.b32.xlu0 %v67, 127
    %v89 = vpop.permute.xlu0 %88
    %90 = vrot.lane.b32.xlu0 %v68, 127
    %v91 = vpop.permute.xlu0 %90
    %92 = vrot.lane.b32.xlu0 %v69, 127
    %v93 = vpop.permute.xlu0 %92
    %94 = vrot.lane.b32.xlu0 %v70, 127
    %v95 = vpop.permute.xlu0 %94
    %96 = vrot.lane.b32.xlu0 %v71, 127
    %v97 = vpop.permute.xlu0 %96
    %98 = vrot.lane.b32.xlu0 %v72, 127
    %v99 = vpop.permute.xlu0 %98
    %100 = vrot.lane.b32.xlu0 %v73, 127
    %v101 = vpop.permute.xlu0 %100
    %v110 = vsel %vm77, %v87, 0.0
    %v111 = vsel %vm77, %v89, 0.0
    %v112 = vsel %vm77, %v91, 0.0
    %v113 = vsel %vm77, %v93, 0.0
    %v114 = vsel %vm77, %v95, 0.0
    %v115 = vsel %vm77, %v97, 0.0
    %v116 = vsel %vm77, %v99, 0.0
    %v117 = vsel %vm77, %v101, 0.0
    %v118 = vmul.f32 %v110, %v110
    %v119 = vmul.f32 %v111, %v111
    %v120 = vmul.f32 %v112, %v112
    %v121 = vmul.f32 %v113, %v113
    %v122 = vmul.f32 %v114, %v114
    %v123 = vmul.f32 %v115, %v115
    %v124 = vmul.f32 %v116, %v116
    %v125 = vmul.f32 %v117, %v117
    %vm126 = vcmask 252928
    %v127 = vsel %vm126, %v118, 0.0
    %v128 = vsel %vm126, %v119, 0.0
    %v129 = vadd.f32 %v127, %v128
    %v130 = vsel %vm126, %v120, 0.0
    %v131 = vadd.f32 %v129, %v130
    %v132 = vsel %vm126, %v121, 0.0
    %v133 = vadd.f32 %v131, %v132
    %v134 = vsel %vm126, %v122, 0.0
    %v135 = vadd.f32 %v133, %v134
    %v136 = vsel %vm126, %v123, 0.0
    %v137 = vadd.f32 %v135, %v136
    %v138 = vsel %vm126, %v124, 0.0
    %v139 = vadd.f32 %v137, %v138
    %v140 = vsel %vm126, %v125, 0.0
    %v141 = vadd.f32 %v139, %v140
    %142 = vadd.xlane.f32.xlu0 %v141
    %v143 = vpop.xlane.xlu0 %142
    %v144 = vrot.slane %v143, 4
    %v145 = vadd.f32 %v143, %v144
    %v146 = vrot.slane %v145, 2
    %v147 = vadd.f32 %v145, %v146
    %v148 = vrot.slane %v147, 1
    %v149 = vadd.f32 %v147, %v148
    %s150 = vtos %v149
    %151 = vrot.lane.b32.xlu0 %v26, 16
    %v152 = vpop.permute.xlu0 %151
    %153 = vrot.lane.b32.xlu0 %v27, 16
    %v154 = vpop.permute.xlu0 %153
    %155 = vrot.lane.b32.xlu0 %v28, 16
    %v156 = vpop.permute.xlu0 %155
    %157 = vrot.lane.b32.xlu0 %v29, 16
    %v158 = vpop.permute.xlu0 %157
    %159 = vrot.lane.b32.xlu0 %v30, 16
    %v160 = vpop.permute.xlu0 %159
    %161 = vrot.lane.b32.xlu0 %v31, 16
    %v162 = vpop.permute.xlu0 %161
    %163 = vrot.lane.b32.xlu0 %v32, 16
    %v164 = vpop.permute.xlu0 %163
    %165 = vrot.lane.b32.xlu0 %v33, 16
    %v166 = vpop.permute.xlu0 %165
    %v175 = vsub.f32 %v26, %v152
    %v176 = vsub.f32 %v27, %v154
    %v177 = vsub.f32 %v28, %v156
    %v178 = vsub.f32 %v29, %v158
    %v179 = vsub.f32 %v30, %v160
    %v180 = vsub.f32 %v31, %v162
    %v181 = vsub.f32 %v32, %v164
    %v182 = vsub.f32 %v33, %v166
    %v183 = vmul.f32 %v175, %v175
    %v184 = vmul.f32 %v176, %v176
    %v185 = vmul.f32 %v177, %v177
    %v186 = vmul.f32 %v178, %v178
    %v187 = vmul.f32 %v179, %v179
    %v188 = vmul.f32 %v180, %v180
    %v189 = vmul.f32 %v181, %v181
    %v190 = vmul.f32 %v182, %v182
    %199 = vrot.lane.b32.xlu0 %v183, 112
    %v200 = vpop.permute.xlu0 %199
    %201 = vrot.lane.b32.xlu0 %v184, 112
    %v202 = vpop.permute.xlu0 %201
    %203 = vrot.lane.b32.xlu0 %v185, 112
    %v204 = vpop.permute.xlu0 %203
    %205 = vrot.lane.b32.xlu0 %v186, 112
    %v206 = vpop.permute.xlu0 %205
    %207 = vrot.lane.b32.xlu0 %v187, 112
    %v208 = vpop.permute.xlu0 %207
    %209 = vrot.lane.b32.xlu0 %v188, 112
    %v210 = vpop.permute.xlu0 %209
    %211 = vrot.lane.b32.xlu0 %v189, 112
    %v212 = vpop.permute.xlu0 %211
    %213 = vrot.lane.b32.xlu0 %v190, 112
    %v214 = vpop.permute.xlu0 %213
    %vm223 = vcmask 130048
    %v224 = vsel %vm223, %v200, 0.0
    %v225 = vsel %vm223, %v202, 0.0
    %v226 = vadd.f32 %v224, %v225
    %v227 = vsel %vm223, %v204, 0.0
    %v228 = vadd.f32 %v226, %v227
    %v229 = vsel %vm223, %v206, 0.0
    %v230 = vadd.f32 %v228, %v229
    %v231 = vsel %vm223, %v208, 0.0
    %v232 = vadd.f32 %v230, %v231
    %v233 = vsel %vm223, %v210, 0.0
    %v234 = vadd.f32 %v232, %v233
    %v235 = vsel %vm223, %v212, 0.0
    %v236 = vadd.f32 %v234, %v235
    %v237 = vsel %vm223, %v214, 0.0
    %v238 = vadd.f32 %v236, %v237
    %239 = vadd.xlane.f32.xlu0 %v238
    %v240 = vpop.xlane.xlu0 %239
    %v241 = vrot.slane %v240, 4
    %v242 = vadd.f32 %v240, %v241
    %v243 = vrot.slane %v242, 2
    %v244 = vadd.f32 %v242, %v243
    %v245 = vrot.slane %v244, 1
    %v246 = vadd.f32 %v244, %v245
    %s247 = vtos %v246
    %s248 = sadd.f32 %s247, 0.0
    %v249 = vrot.slane %v26, 7
    %v250 = vrot.slane %v27, 7
    %v251 = vrot.slane %v28, 7
    %v252 = vrot.slane %v29, 7
    %v253 = vrot.slane %v30, 7
    %v254 = vrot.slane %v31, 7
    %v255 = vrot.slane %v32, 7
    %v256 = vrot.slane %v33, 7
    %257 = vrot.lane.b32.xlu0 %v249, 112
    %v258 = vpop.permute.xlu0 %257
    %259 = vrot.lane.b32.xlu0 %v250, 112
    %v260 = vpop.permute.xlu0 %259
    %261 = vrot.lane.b32.xlu0 %v251, 112
    %v262 = vpop.permute.xlu0 %261
    %263 = vrot.lane.b32.xlu0 %v252, 112
    %v264 = vpop.permute.xlu0 %263
    %265 = vrot.lane.b32.xlu0 %v253, 112
    %v266 = vpop.permute.xlu0 %265
    %267 = vrot.lane.b32.xlu0 %v254, 112
    %v268 = vpop.permute.xlu0 %267
    %269 = vrot.lane.b32.xlu0 %v255, 112
    %v270 = vpop.permute.xlu0 %269
    %271 = vrot.lane.b32.xlu0 %v256, 112
    %v272 = vpop.permute.xlu0 %271
    %v281 = vsub.f32 %v26, %v258
    %v282 = vsub.f32 %v27, %v260
    %v283 = vsub.f32 %v28, %v262
    %v284 = vsub.f32 %v29, %v264
    %v285 = vsub.f32 %v30, %v266
    %v286 = vsub.f32 %v31, %v268
    %v287 = vsub.f32 %v32, %v270
    %v288 = vsub.f32 %v33, %v272
    %v289 = vmul.f32 %v281, %v281
    %v290 = vmul.f32 %v282, %v282
    %v291 = vmul.f32 %v283, %v283
    %v292 = vmul.f32 %v284, %v284
    %v293 = vmul.f32 %v285, %v285
    %v294 = vmul.f32 %v286, %v286
    %v295 = vmul.f32 %v287, %v287
    %v296 = vmul.f32 %v288, %v288
    %v305 = vrot.slane %v289, 1
    %v306 = vrot.slane %v290, 1
    %v307 = vrot.slane %v291, 1
    %v308 = vrot.slane %v292, 1
    %v309 = vrot.slane %v293, 1
    %v310 = vrot.slane %v294, 1
    %v311 = vrot.slane %v295, 1
    %v312 = vrot.slane %v296, 1
    %vm321 = vcmask 129024
    %v322 = vsel %vm321, %v305, 0.0
    %v323 = vsel %vm321, %v306, 0.0
    %v324 = vadd.f32 %v322, %v323
    %v325 = vsel %vm321, %v307, 0.0
    %v326 = vadd.f32 %v324, %v325
    %v327 = vsel %vm321, %v308, 0.0
    %v328 = vadd.f32 %v326, %v327
    %v329 = vsel %vm321, %v309, 0.0
    %v330 = vadd.f32 %v328, %v329
    %v331 = vsel %vm321, %v310, 0.0
    %v332 = vadd.f32 %v330, %v331
    %v333 = vsel %vm321, %v311, 0.0
    %v334 = vadd.f32 %v332, %v333
    %v335 = vsel %vm321, %v312, 0.0
    %v336 = vadd.f32 %v334, %v335
    %337 = vadd.xlane.f32.xlu0 %v336
    %v338 = vpop.xlane.xlu0 %337
    %v339 = vrot.slane %v338, 4
    %v340 = vadd.f32 %v338, %v339
    %v341 = vrot.slane %v340, 2
    %v342 = vadd.f32 %v340, %v341
    %v343 = vrot.slane %v342, 1
    %v344 = vadd.f32 %v342, %v343
    %s345 = vtos %v344
    %s346 = sadd.f32 %s248, %s345
    %v347 = vstv %s346
    %vm348 = vcmask 0
    %349 = vst.msk [vmem:[#allocation5] sm:$0x1] %vm348, %v347
    %v350 = vstv %s150
    %351 = vst.msk [vmem:[#allocation6] sm:$0x1] %vm348, %v350
    // Predicated region
    $region10: #{tpu_custom_call.1} parent=1 // pred_check
      _
    $region11: #{tpu_custom_call.1} parent=1 // pred_check_branch
      %353 = sbr.rel (0) target = $region13
    $region12: #{tpu_custom_call.1} parent=1 // pred_region
      %s355 = ssub.s32 16, 16
      %356 = vsyncadd [#allocation4], %s355
      %s358 = sshll.u32 [#allocation5], 4
      %s359 = int_to_ptr.vmem [resolvable:$true] %s358
      %361 = dma.vmem_to_hbm [thread:$0]  %s359, 16, %s1, [#allocation4]
    $region13: #{tpu_custom_call.1} parent=1 // pred_fallthru
      _
    // Predicated region
    $region14: #{tpu_custom_call.1} parent=1 // pred_check
      _
    $region15: #{tpu_custom_call.1} parent=1 // pred_check_branch
      %363 = sbr.rel (0) target = $region17
    $region16: #{tpu_custom_call.1} parent=1 // pred_region
      %s365 = ssub.s32 16, 16
      %366 = vsyncadd [#allocation7], %s365
      %s368 = sshll.u32 [#allocation6], 4
      %s369 = int_to_ptr.vmem [resolvable:$true] %s368
      %371 = dma.vmem_to_hbm [thread:$0]  %s369, 16, %s2, [#allocation7]
    $region17: #{tpu_custom_call.1} parent=1 // pred_fallthru
      _
    // Predicated region
    $region18: #{tpu_custom_call.1} parent=1 // pred_check
      _
    $region19: #{tpu_custom_call.1} parent=1 // pred_check_branch
      %373 = sbr.rel (0) target = $region21
    $region20: #{tpu_custom_call.1} parent=1 // pred_region
      %374 = dma.done [#allocation4], 16
    $region21: #{tpu_custom_call.1} parent=1 // pred_fallthru
      _
    // Predicated region
    $region22: #{tpu_custom_call.1} parent=1 // pred_check
      _
    $region23: #{tpu_custom_call.1} parent=1 // pred_check_branch
      %376 = sbr.rel (0) target = $region25
    $region24: #{tpu_custom_call.1} parent=1 // pred_region
      %377 = dma.done [#allocation7], 16
    $region25: #{tpu_custom_call.1} parent=1 // pred_fallthru
      _
    %378 = vsyncpa [#allocation3], 1
    %379 = vsyncpa [#allocation4], 1
    %380 = vsyncpa [#allocation7], 1

</llo_original>
